<compile_context>
chip_gen: v7x
topology: tpu7x:2x2x1
jax: 0.10.0
libtpu: 0.0.40
codegen_flags: <defaults>
</compile_context>

<pallas_src>
import math

import jax
import jax.numpy as jnp
from jax import lax
from jax.experimental import pallas as pl
from jax.experimental.pallas import tpu as pltpu


def fusion_kernel(img_ref, black_ref, wpack_ref, wfc_ref, bias_ref, out_ref):
    f32 = jnp.float32
    bf16 = jnp.bfloat16
    B, D = img_ref.shape

    def bias(lo, width):
        # Static lane slice of the packed (1, 9D) f32 parameter row.
        return bias_ref[:, lo:lo + width]

    img = img_ref[...]      # (B, D) f32
    black = black_ref[...]  # (B, D) f32

    # Rows 0..B-1 = img (token 0), rows B..2B-1 = black (token 1); cast before concat.
    x_bf = jnp.concatenate([img.astype(bf16), black.astype(bf16)], axis=0)  # (2B, D) bf16

    # ---- fc1(black) / fc2(img) + ReLU, fused as one (2B, D) @ (D, 2D) matmul ------
    # Packed weight columns: [w1 | w2 | wq | wk | wv | wo].
    y12 = jnp.dot(x_bf, wpack_ref[:, 0:2 * D], preferred_element_type=f32)  # (2B, 2D)
    fi1 = jnp.maximum(y12[:B, D:2 * D] + bias(D, D), 0.0)   # relu(fc2(img))
    fb1 = jnp.maximum(y12[B:, 0:D] + bias(0, D), 0.0)       # relu(fc1(black))

    # ---- hadamard product + softmax over the feature (lane) dim --------------------
    had = fb1 * fi1
    e = jnp.exp(had - jnp.max(had, axis=-1, keepdims=True))
    sim = e * pl.reciprocal(jnp.sum(e, axis=-1, keepdims=True), approx=True)

    # x + x * sim == x * (1 + sim); build the modulated 2-token sequence in bf16.
    mod = 1.0 + sim
    x_mod = jnp.concatenate([(img * mod).astype(bf16),
                             (black * mod).astype(bf16)], axis=0)            # (2B, D) bf16

    # ---- single-head MultiheadAttention over the 2-token sequence ------------------
    # Fused QKV: one (2B, D) @ (D, 3D) matmul; 1/sqrt(D) score scale pre-folded into Q.
    qkv = jnp.dot(x_mod, wpack_ref[:, 2 * D:5 * D],
                  preferred_element_type=f32) + bias(2 * D, 3 * D)           # (2B, 3D)
    q = qkv[:, 0:D]
    k = qkv[:, D:2 * D]
    v = qkv[:, 2 * D:3 * D]
    k_swap = jnp.concatenate([k[B:], k[:B]], axis=0)   # keys of the *other* token
    v_swap = jnp.concatenate([v[B:], v[:B]], axis=0)

    # Per-row scores with own key and the other token's key -> (2B, 2), one softmax.
    s_same = jnp.sum(q * k, axis=-1, keepdims=True)
    s_swap = jnp.sum(q * k_swap, axis=-1, keepdims=True)
    s = jnp.concatenate([s_same, s_swap], axis=1)                            # (2B, 2)
    es = jnp.exp(s - jnp.max(s, axis=-1, keepdims=True))
    p = es * pl.reciprocal(jnp.sum(es, axis=-1, keepdims=True), approx=True)
    attn = (p[:, 0:1] * v + p[:, 1:2] * v_swap).astype(bf16)                 # (2B, D)

    # Fused out-projection: one (2B, D) @ (D, D) matmul.
    o = jnp.dot(attn, wpack_ref[:, 5 * D:6 * D],
                preferred_element_type=f32) + bias(5 * D, D)                 # (2B, D)
    o_bf = o.astype(bf16)

    # ---- full_connect on cat([features1 (img), features2 (black)], dim=1) ---------
    fc_in = jnp.concatenate([o_bf[:B], o_bf[B:]], axis=1)                    # (B, 2D) bf16
    f3 = jnp.dot(fc_in, wfc_ref[...], preferred_element_type=f32) + bias(6 * D, D)

    # ---- BatchNorm1d, training mode (batch stats, biased variance, eps=1e-5) ------
    # TODO(synk): running_mean / running_var buffer updates (a training side effect)
    # are not modeled; only the forward output is produced.
    mean = jnp.mean(f3, axis=0, keepdims=True)
    var = jnp.mean((f3 - mean) ** 2, axis=0, keepdims=True)
    bn = (f3 - mean) * lax.rsqrt(var + 1e-5) * bias(7 * D, D) + bias(8 * D, D)

    # F.normalize: L2 over dim=1.  Clamp on norm^2 (eps^2 = 1e-24) instead of norm.
    sq = jnp.sum(bn * bn, axis=-1, keepdims=True)
    out_ref[...] = (bn * lax.rsqrt(jnp.maximum(sq, 1e-24))).astype(out_ref.dtype)


def fusion_forward(features_img, features_black, params):
    B, D = features_img.shape
    args = (features_img, features_black,
            params["w_pack"], params["wfc"], params["bias_pack"])

    weight_bytes = sum(int(a.size) * a.dtype.itemsize for a in args[2:])
    io_bytes = 3 * B * D * 4                 # two f32 inputs + one f32 output
    act_bytes = 24 * B * D * 4               # rough peak live activations (f32-equiv)
    cost = pl.CostEstimate(
        flops=28 * B * D * D,                # the 4 fused matmuls
        transcendentals=B * D + 6 * B + 2 * D,
        bytes_accessed=weight_bytes + io_bytes)

    # Explicit scoped-VMEM budget: real footprint + margin, capped for v7x (64 MiB).
    vmem_limit = min(64 << 20, 2 * (weight_bytes + io_bytes) + act_bytes + (4 << 20))

    vmem = lambda: pl.BlockSpec(memory_space=pltpu.MemorySpace.VMEM)
    return pl.pallas_call(
        fusion_kernel,
        out_shape=jax.ShapeDtypeStruct((B, D), jnp.float32),
        in_specs=[vmem() for _ in args],
        out_specs=vmem(),
        cost_estimate=cost,
        compiler_params=pltpu.CompilerParams(vmem_limit_bytes=int(vmem_limit)),
    )(*args)


def init_params(key, d):
    ks = jax.random.split(key, 6)
    bf16 = jnp.bfloat16

    def kaiming_fan_out_T(k, out_f, in_f):
        # PyTorch Linear weight is (out, in); kaiming_normal_(mode='fan_out') -> std=sqrt(2/out).
        # Return transposed (in, out) for x @ W in the kernel.
        w = jax.random.normal(k, (out_f, in_f), jnp.float32) * math.sqrt(2.0 / out_f)
        return jnp.transpose(w)

    zrow = jnp.zeros((1, d), jnp.float32)

    # fc1 (applied to black) / fc2 (applied to img)
    w1 = kaiming_fan_out_T(ks[0], d, d)
    w2 = kaiming_fan_out_T(ks[1], d, d)

    # MultiheadAttention (num_heads=1): in_proj (3D, D) ~ xavier_uniform, in_proj_bias = 0,
    # out_proj weight ~ U(-1/sqrt(D), 1/sqrt(D)), out_proj bias = 0.
    bound = math.sqrt(6.0 / (3 * d + d))
    in_proj = jax.random.uniform(ks[2], (3 * d, d), jnp.float32, -bound, bound)
    scale = 1.0 / math.sqrt(d)
    wq = jnp.transpose(in_proj[0:d]) * scale          # fold 1/sqrt(D) score scale into Q
    wk = jnp.transpose(in_proj[d:2 * d])
    wv = jnp.transpose(in_proj[2 * d:3 * d])

    wo = jnp.transpose(
        jax.random.uniform(ks[3], (d, d), jnp.float32,
                           -1.0 / math.sqrt(d), 1.0 / math.sqrt(d)))

    # full_connect: PyTorch weight (D, 2D), kaiming fan_out; stored transposed (2D, D).
    wfc = jnp.transpose(
        jax.random.normal(ks[4], (d, 2 * d), jnp.float32) * math.sqrt(2.0 / d))

    # Packed weight operand: [w1 | w2 | wq | wk | wv | wo]  -> (D, 6D) bf16.
    w_pack = jnp.concatenate([w1, w2, wq, wk, wv, wo], axis=1).astype(bf16)

    # Packed parameter row: [b1 | b2 | bq*scale | bk | bv | bo | bfc | gamma | beta]
    # (all biases are zero at init; gamma = full_bn.weight = 1, beta frozen at 0).
    bias_pack = jnp.concatenate(
        [zrow, zrow, zrow * scale, zrow, zrow, zrow, zrow,
         jnp.ones((1, d), jnp.float32), zrow], axis=1)          # (1, 9D) f32

    return {"w_pack": w_pack, "wfc": wfc.astype(bf16), "bias_pack": bias_pack}


if __name__ == "__main__":
    B, D = 8, 128
    key = jax.random.PRNGKey(0)
    k_img, k_black, k_params = jax.random.split(key, 3)
    features_img = jax.random.normal(k_img, (B, D), jnp.float32)
    features_black = jax.random.normal(k_black, (B, D), jnp.float32)
    params = init_params(k_params, D)

    out = fusion_forward(features_img, features_black, params)
    jax.block_until_ready(out)
    assert out.shape == (B, D) and out.dtype == jnp.float32
    assert bool(jnp.all(jnp.isfinite(out)))
    print("KERNEL_OK")
</pallas_src>

<mosaic_0001>
module attributes {stable_mosaic.version = 11 : i64} {
  func.func @fusion_kernel(%arg0: memref<8x128xf32, #tpu.memory_space<vmem>>, %arg1: memref<8x128xf32, #tpu.memory_space<vmem>>, %arg2: memref<128x768xbf16, #tpu.memory_space<vmem>>, %arg3: memref<256x128xbf16, #tpu.memory_space<vmem>>, %arg4: memref<1x1152xf32, #tpu.memory_space<vmem>>, %arg5: memref<8x128xf32, #tpu.memory_space<vmem>>) attributes {dimension_semantics = [], scalar_prefetch = 0 : i64, scratch_operands = 0 : i64, tpu.core_type = #tpu.core_type<tc>} {
    %c0 = arith.constant 0 : index
    %c0_0 = arith.constant 0 : index
    %0 = vector.load %arg0[%c0, %c0_0] : memref<8x128xf32, #tpu.memory_space<vmem>>, vector<8x128xf32>
    %c0_1 = arith.constant 0 : index
    %c0_2 = arith.constant 0 : index
    %1 = vector.load %arg1[%c0_1, %c0_2] : memref<8x128xf32, #tpu.memory_space<vmem>>, vector<8x128xf32>
    %2 = arith.truncf %0 : vector<8x128xf32> to vector<8x128xbf16>
    %3 = arith.truncf %1 : vector<8x128xf32> to vector<8x128xbf16>
    %4 = tpu.concatenate %2, %3 in 0 : vector<8x128xbf16>, vector<8x128xbf16> -> vector<16x128xbf16>
    %c0_3 = arith.constant 0 : index
    %c0_4 = arith.constant 0 : index
    %5 = vector.load %arg2[%c0_3, %c0_4] : memref<128x768xbf16, #tpu.memory_space<vmem>>, vector<128x256xbf16>
    %cst = arith.constant dense<0.000000e+00> : vector<16x256xf32>
    %6 = tpu.matmul %4, %5, %cst {dimension_numbers = #tpu.dot_dimension_numbers<[1], [0], [0], [1], [0, 0, 1, 1], [], []>} : vector<16x128xbf16>, vector<128x256xbf16>, vector<16x256xf32> -> vector<16x256xf32>
    %7 = vector.extract_strided_slice %6 {offsets = [0, 128], sizes = [8, 128], strides = [1, 1]} : vector<16x256xf32> to vector<8x128xf32>
    %c0_5 = arith.constant 0 : index
    %c128 = arith.constant 128 : index
    %8 = vector.load %arg4[%c0_5, %c128] : memref<1x1152xf32, #tpu.memory_space<vmem>>, vector<1x128xf32>
    %9 = vector.broadcast %8 : vector<1x128xf32> to vector<8x128xf32>
    %10 = arith.addf %7, %9 : vector<8x128xf32>
    %cst_6 = arith.constant 0.000000e+00 : f32
    %11 = vector.broadcast %cst_6 : f32 to vector<8x128xf32>
    %12 = arith.maximumf %10, %11 : vector<8x128xf32>
    %13 = vector.extract_strided_slice %6 {offsets = [8, 0], sizes = [8, 128], strides = [1, 1]} : vector<16x256xf32> to vector<8x128xf32>
    %c0_7 = arith.constant 0 : index
    %c0_8 = arith.constant 0 : index
    %14 = vector.load %arg4[%c0_7, %c0_8] : memref<1x1152xf32, #tpu.memory_space<vmem>>, vector<1x128xf32>
    %15 = vector.broadcast %14 : vector<1x128xf32> to vector<8x128xf32>
    %16 = arith.addf %13, %15 : vector<8x128xf32>
    %cst_9 = arith.constant 0.000000e+00 : f32
    %17 = vector.broadcast %cst_9 : f32 to vector<8x128xf32>
    %18 = arith.maximumf %16, %17 : vector<8x128xf32>
    %19 = arith.mulf %18, %12 : vector<8x128xf32>
    %cst_10 = arith.constant dense<0xFF800000> : vector<8xf32>
    %20 = vector.multi_reduction <maximumf>, %19, %cst_10 [1] : vector<8x128xf32> to vector<8xf32>
    %21 = vector.shape_cast %20 : vector<8xf32> to vector<8x1xf32>
    %22 = vector.broadcast %21 : vector<8x1xf32> to vector<8x128xf32>
    %23 = arith.subf %19, %22 : vector<8x128xf32>
    %24 = math.exp %23 : vector<8x128xf32>
    %cst_11 = arith.constant dense<0.000000e+00> : vector<8xf32>
    %25 = vector.multi_reduction <add>, %24, %cst_11 [1] : vector<8x128xf32> to vector<8xf32>
    %26 = vector.shape_cast %25 : vector<8xf32> to vector<8x1xf32>
    %27 = tpu.reciprocal %26 {approx = true} : vector<8x1xf32> -> vector<8x1xf32>
    %28 = vector.broadcast %27 : vector<8x1xf32> to vector<8x128xf32>
    %29 = arith.mulf %24, %28 : vector<8x128xf32>
    %cst_12 = arith.constant 1.000000e+00 : f32
    %30 = vector.broadcast %cst_12 : f32 to vector<8x128xf32>
    %31 = arith.addf %30, %29 : vector<8x128xf32>
    %32 = arith.mulf %0, %31 : vector<8x128xf32>
    %33 = arith.truncf %32 : vector<8x128xf32> to vector<8x128xbf16>
    %34 = arith.mulf %1, %31 : vector<8x128xf32>
    %35 = arith.truncf %34 : vector<8x128xf32> to vector<8x128xbf16>
    %36 = tpu.concatenate %33, %35 in 0 : vector<8x128xbf16>, vector<8x128xbf16> -> vector<16x128xbf16>
    %c0_13 = arith.constant 0 : index
    %c256 = arith.constant 256 : index
    %37 = vector.load %arg2[%c0_13, %c256] : memref<128x768xbf16, #tpu.memory_space<vmem>>, vector<128x384xbf16>
    %cst_14 = arith.constant dense<0.000000e+00> : vector<16x384xf32>
    %38 = tpu.matmul %36, %37, %cst_14 {dimension_numbers = #tpu.dot_dimension_numbers<[1], [0], [0], [1], [0, 0, 1, 1], [], []>} : vector<16x128xbf16>, vector<128x384xbf16>, vector<16x384xf32> -> vector<16x384xf32>
    %c0_15 = arith.constant 0 : index
    %c256_16 = arith.constant 256 : index
    %39 = vector.load %arg4[%c0_15, %c256_16] : memref<1x1152xf32, #tpu.memory_space<vmem>>, vector<1x384xf32>
    %40 = vector.broadcast %39 : vector<1x384xf32> to vector<16x384xf32>
    %41 = arith.addf %38, %40 : vector<16x384xf32>
    %42 = vector.extract_strided_slice %41 {offsets = [0, 0], sizes = [16, 128], strides = [1, 1]} : vector<16x384xf32> to vector<16x128xf32>
    %43 = vector.extract_strided_slice %41 {offsets = [0, 128], sizes = [16, 128], strides = [1, 1]} : vector<16x384xf32> to vector<16x128xf32>
    %44 = vector.extract_strided_slice %41 {offsets = [0, 256], sizes = [16, 128], strides = [1, 1]} : vector<16x384xf32> to vector<16x128xf32>
    %45 = vector.extract_strided_slice %43 {offsets = [8, 0], sizes = [8, 128], strides = [1, 1]} : vector<16x128xf32> to vector<8x128xf32>
    %46 = vector.extract_strided_slice %43 {offsets = [0, 0], sizes = [8, 128], strides = [1, 1]} : vector<16x128xf32> to vector<8x128xf32>
    %47 = tpu.concatenate %45, %46 in 0 : vector<8x128xf32>, vector<8x128xf32> -> vector<16x128xf32>
    %48 = vector.extract_strided_slice %44 {offsets = [8, 0], sizes = [8, 128], strides = [1, 1]} : vector<16x128xf32> to vector<8x128xf32>
    %49 = vector.extract_strided_slice %44 {offsets = [0, 0], sizes = [8, 128], strides = [1, 1]} : vector<16x128xf32> to vector<8x128xf32>
    %50 = tpu.concatenate %48, %49 in 0 : vector<8x128xf32>, vector<8x128xf32> -> vector<16x128xf32>
    %51 = arith.mulf %42, %43 : vector<16x128xf32>
    %cst_17 = arith.constant dense<0.000000e+00> : vector<16xf32>
    %52 = vector.multi_reduction <add>, %51, %cst_17 [1] : vector<16x128xf32> to vector<16xf32>
    %53 = vector.shape_cast %52 : vector<16xf32> to vector<16x1xf32>
    %54 = arith.mulf %42, %47 : vector<16x128xf32>
    %cst_18 = arith.constant dense<0.000000e+00> : vector<16xf32>
    %55 = vector.multi_reduction <add>, %54, %cst_18 [1] : vector<16x128xf32> to vector<16xf32>
    %56 = vector.shape_cast %55 : vector<16xf32> to vector<16x1xf32>
    %57 = tpu.concatenate %53, %56 in 1 : vector<16x1xf32>, vector<16x1xf32> -> vector<16x2xf32>
    %cst_19 = arith.constant dense<0xFF800000> : vector<16xf32>
    %58 = vector.multi_reduction <maximumf>, %57, %cst_19 [1] : vector<16x2xf32> to vector<16xf32>
    %59 = vector.shape_cast %58 : vector<16xf32> to vector<16x1xf32>
    %60 = vector.broadcast %59 : vector<16x1xf32> to vector<16x2xf32>
    %61 = arith.subf %57, %60 : vector<16x2xf32>
    %62 = math.exp %61 : vector<16x2xf32>
    %cst_20 = arith.constant dense<0.000000e+00> : vector<16xf32>
    %63 = vector.multi_reduction <add>, %62, %cst_20 [1] : vector<16x2xf32> to vector<16xf32>
    %64 = vector.shape_cast %63 : vector<16xf32> to vector<16x1xf32>
    %65 = tpu.reciprocal %64 {approx = true} : vector<16x1xf32> -> vector<16x1xf32>
    %66 = vector.broadcast %65 : vector<16x1xf32> to vector<16x2xf32>
    %67 = arith.mulf %62, %66 : vector<16x2xf32>
    %68 = vector.extract_strided_slice %67 {offsets = [0, 0], sizes = [16, 1], strides = [1, 1]} : vector<16x2xf32> to vector<16x1xf32>
    %69 = vector.broadcast %68 : vector<16x1xf32> to vector<16x128xf32>
    %70 = arith.mulf %69, %44 : vector<16x128xf32>
    %71 = vector.extract_strided_slice %67 {offsets = [0, 1], sizes = [16, 1], strides = [1, 1]} : vector<16x2xf32> to vector<16x1xf32>
    %72 = vector.broadcast %71 : vector<16x1xf32> to vector<16x128xf32>
    %73 = arith.mulf %72, %50 : vector<16x128xf32>
    %74 = arith.addf %70, %73 : vector<16x128xf32>
    %75 = arith.truncf %74 : vector<16x128xf32> to vector<16x128xbf16>
    %c0_21 = arith.constant 0 : index
    %c640 = arith.constant 640 : index
    %76 = vector.load %arg2[%c0_21, %c640] : memref<128x768xbf16, #tpu.memory_space<vmem>>, vector<128x128xbf16>
    %cst_22 = arith.constant dense<0.000000e+00> : vector<16x128xf32>
    %77 = tpu.matmul %75, %76, %cst_22 {dimension_numbers = #tpu.dot_dimension_numbers<[1], [0], [0], [1], [0, 0, 1, 1], [], []>} : vector<16x128xbf16>, vector<128x128xbf16>, vector<16x128xf32> -> vector<16x128xf32>
    %c0_23 = arith.constant 0 : index
    %c640_24 = arith.constant 640 : index
    %78 = vector.load %arg4[%c0_23, %c640_24] : memref<1x1152xf32, #tpu.memory_space<vmem>>, vector<1x128xf32>
    %79 = vector.broadcast %78 : vector<1x128xf32> to vector<16x128xf32>
    %80 = arith.addf %77, %79 : vector<16x128xf32>
    %81 = arith.truncf %80 : vector<16x128xf32> to vector<16x128xbf16>
    %82 = vector.extract_strided_slice %81 {offsets = [0, 0], sizes = [8, 128], strides = [1, 1]} : vector<16x128xbf16> to vector<8x128xbf16>
    %83 = vector.extract_strided_slice %81 {offsets = [8, 0], sizes = [8, 128], strides = [1, 1]} : vector<16x128xbf16> to vector<8x128xbf16>
    %84 = tpu.concatenate %82, %83 in 1 : vector<8x128xbf16>, vector<8x128xbf16> -> vector<8x256xbf16>
    %c0_25 = arith.constant 0 : index
    %c0_26 = arith.constant 0 : index
    %85 = vector.load %arg3[%c0_25, %c0_26] : memref<256x128xbf16, #tpu.memory_space<vmem>>, vector<256x128xbf16>
    %cst_27 = arith.constant dense<0.000000e+00> : vector<8x128xf32>
    %86 = tpu.matmul %84, %85, %cst_27 {dimension_numbers = #tpu.dot_dimension_numbers<[1], [0], [0], [1], [0, 0, 1, 1], [], []>} : vector<8x256xbf16>, vector<256x128xbf16>, vector<8x128xf32> -> vector<8x128xf32>
    %c0_28 = arith.constant 0 : index
    %c768 = arith.constant 768 : index
    %87 = vector.load %arg4[%c0_28, %c768] : memref<1x1152xf32, #tpu.memory_space<vmem>>, vector<1x128xf32>
    %88 = vector.broadcast %87 : vector<1x128xf32> to vector<8x128xf32>
    %89 = arith.addf %86, %88 : vector<8x128xf32>
    %cst_29 = arith.constant dense<0.000000e+00> : vector<128xf32>
    %90 = vector.multi_reduction <add>, %89, %cst_29 [0] : vector<8x128xf32> to vector<128xf32>
    %91 = vector.shape_cast %90 : vector<128xf32> to vector<1x128xf32>
    %cst_30 = arith.constant 8.000000e+00 : f32
    %92 = vector.broadcast %cst_30 : f32 to vector<1x128xf32>
    %93 = arith.divf %91, %92 : vector<1x128xf32>
    %94 = vector.broadcast %93 : vector<1x128xf32> to vector<8x128xf32>
    %95 = arith.subf %89, %94 : vector<8x128xf32>
    %96 = arith.mulf %95, %95 : vector<8x128xf32>
    %cst_31 = arith.constant dense<0.000000e+00> : vector<128xf32>
    %97 = vector.multi_reduction <add>, %96, %cst_31 [0] : vector<8x128xf32> to vector<128xf32>
    %98 = vector.shape_cast %97 : vector<128xf32> to vector<1x128xf32>
    %cst_32 = arith.constant 8.000000e+00 : f32
    %99 = vector.broadcast %cst_32 : f32 to vector<1x128xf32>
    %100 = arith.divf %98, %99 : vector<1x128xf32>
    %101 = vector.broadcast %93 : vector<1x128xf32> to vector<8x128xf32>
    %102 = arith.subf %89, %101 : vector<8x128xf32>
    %cst_33 = arith.constant 9.99999974E-6 : f32
    %103 = vector.broadcast %cst_33 : f32 to vector<1x128xf32>
    %104 = arith.addf %100, %103 : vector<1x128xf32>
    %105 = math.rsqrt %104 : vector<1x128xf32>
    %106 = vector.broadcast %105 : vector<1x128xf32> to vector<8x128xf32>
    %107 = arith.mulf %102, %106 : vector<8x128xf32>
    %c0_34 = arith.constant 0 : index
    %c896 = arith.constant 896 : index
    %108 = vector.load %arg4[%c0_34, %c896] : memref<1x1152xf32, #tpu.memory_space<vmem>>, vector<1x128xf32>
    %109 = vector.broadcast %108 : vector<1x128xf32> to vector<8x128xf32>
    %110 = arith.mulf %107, %109 : vector<8x128xf32>
    %c0_35 = arith.constant 0 : index
    %c1024 = arith.constant 1024 : index
    %111 = vector.load %arg4[%c0_35, %c1024] : memref<1x1152xf32, #tpu.memory_space<vmem>>, vector<1x128xf32>
    %112 = vector.broadcast %111 : vector<1x128xf32> to vector<8x128xf32>
    %113 = arith.addf %110, %112 : vector<8x128xf32>
    %114 = arith.mulf %113, %113 : vector<8x128xf32>
    %cst_36 = arith.constant dense<0.000000e+00> : vector<8xf32>
    %115 = vector.multi_reduction <add>, %114, %cst_36 [1] : vector<8x128xf32> to vector<8xf32>
    %116 = vector.shape_cast %115 : vector<8xf32> to vector<8x1xf32>
    %cst_37 = arith.constant 1.000000e-24 : f32
    %117 = vector.broadcast %cst_37 : f32 to vector<8x1xf32>
    %118 = arith.maximumf %116, %117 : vector<8x1xf32>
    %119 = math.rsqrt %118 : vector<8x1xf32>
    %120 = vector.broadcast %119 : vector<8x1xf32> to vector<8x128xf32>
    %121 = arith.mulf %113, %120 : vector<8x128xf32>
    %c0_38 = arith.constant 0 : index
    %c0_39 = arith.constant 0 : index
    %122 = vector.load %arg5[%c0_38, %c0_39] : memref<8x128xf32, #tpu.memory_space<vmem>>, vector<8x128xf32>
    tpu.vector_store %arg5[%c0_38, %c0_39], %121 {strides = array<i32>} : memref<8x128xf32, #tpu.memory_space<vmem>>, vector<8x128xf32>,
    return
  }
}

</mosaic_0001>

<llo_original>
// kernel: tpu_custom_call.1
$region0: #{tpu_custom_call.1}
  #allocation0 [shape = 'u32[]', space=smem, size = 0x4, offset = 0x4, fixed_abs, tag = 'smem constant byte address 0x4 - core index']
  #allocation1 [shape = 'u32[144,128]{1,0:T(1,128)}', space=vmem, size = 0x12000, scoped, tag = 'internal scratch']
  %s0 = inlined_call_operand.hbm [shape: f32[8,128], index: 0, kind: input, shape index: {}]
  %s1 = inlined_call_operand.hbm [shape: f32[8,128], index: 1, kind: input, shape index: {}]
  %s2 = inlined_call_operand.hbm [shape: bf16[128,768], index: 2, kind: input, shape index: {}]
  %s3 = inlined_call_operand.hbm [shape: bf16[256,128], index: 3, kind: input, shape index: {}]
  %s4 = inlined_call_operand.vmem [shape: f32[1,1152], index: 4, kind: input, shape index: {}]
  %s5 = inlined_call_operand.hbm [shape: f32[8,128], index: 5, kind: output, shape index: {}]
  %s6 = sld [smem:[#allocation0]]
  $region46: #{tpu_custom_call.1} parent=0
    _
  %s8 = ssub.s32 1, %s6
  %s9 = scalar_select 0, %s8, %s6
  $region1: #{tpu_custom_call.1} parent=0
    #allocation2 [shape = 'u8[4096]{0}', space=vmem, size = 0x1000, scoped, tag = 'input window, operand 0, single buffered']
    #allocation3 [shape = 's32[1]{0}', space=sflag, size = 0x4, scoped, tag = 'scoped memory for tpu_custom_call.1']
    #allocation4 [shape = 's32[1]{0}', space=sflag, size = 0x4, scoped, tag = 'scoped memory for tpu_custom_call.1']
    #allocation5 [shape = 'u8[4096]{0}', space=vmem, size = 0x1000, scoped, tag = 'input window, operand 1, single buffered']
    #allocation6 [shape = 's32[1]{0}', space=sflag, size = 0x4, scoped, tag = 'scoped memory for tpu_custom_call.1']
    #allocation7 [shape = 'u8[196608]{0}', space=vmem, size = 0x30000, scoped, tag = 'input window, operand 2, single buffered']
    #allocation8 [shape = 'u8[65536]{0}', space=vmem, size = 0x10000, scoped, tag = 'input window, operand 3, single buffered']
    #allocation9 [shape = 's32[1]{0}', space=sflag, size = 0x4, scoped, tag = 'scoped memory for tpu_custom_call.1']
    #allocation10 [shape = 'u8[4096]{0}', space=vmem, size = 0x1000, scoped, tag = 'output window, operand 0, single buffered']
    %10 = vsyncpa [#allocation3], 0
    %11 = vsyncpa [#allocation6], 0
    %12 = vsyncpa [#allocation9], 0
    %13 = vsyncpa [#allocation4], 0
    // Predicated region
    $region2: #{tpu_custom_call.1} parent=1 // pred_check
      _
    $region3: #{tpu_custom_call.1} parent=1 // pred_check_branch
      %15 = sbr.rel (0) target = $region5
    $region4: #{tpu_custom_call.1} parent=1 // pred_region
      %s17 = ssub.s32 128, 128
      %18 = vsyncadd [#allocation3], %s17
      %s20 = sshll.u32 [#allocation2], 4
      %s21 = int_to_ptr.vmem [resolvable:$true] %s20
      %23 = dma.hbm_to_vmem [thread:$0]  %s0, 128, %s21, [#allocation3]
    $region5: #{tpu_custom_call.1} parent=1 // pred_fallthru
      _
    // Predicated region
    $region6: #{tpu_custom_call.1} parent=1 // pred_check
      _
    $region7: #{tpu_custom_call.1} parent=1 // pred_check_branch
      %25 = sbr.rel (0) target = $region9
    $region8: #{tpu_custom_call.1} parent=1 // pred_region
      %s27 = ssub.s32 128, 128
      %28 = vsyncadd [#allocation6], %s27
      %s30 = sshll.u32 [#allocation5], 4
      %s31 = int_to_ptr.vmem [resolvable:$true] %s30
      %33 = dma.hbm_to_vmem [thread:$0]  %s1, 128, %s31, [#allocation6]
    $region9: #{tpu_custom_call.1} parent=1 // pred_fallthru
      _
    // Predicated region
    $region10: #{tpu_custom_call.1} parent=1 // pred_check
      _
    $region11: #{tpu_custom_call.1} parent=1 // pred_check_branch
      %35 = sbr.rel (0) target = $region13
    $region12: #{tpu_custom_call.1} parent=1 // pred_region
      %s37 = ssub.s32 6144, 6144
      %38 = vsyncadd [#allocation6], %s37
      %s39 = sshll.u32 [#allocation7], 4
      %s40 = int_to_ptr.vmem [resolvable:$true] %s39
      %45 = dma.hbm_to_vmem [thread:$0]  %s2, 6144, %s40, [#allocation6], 384, 384, 24
    $region13: #{tpu_custom_call.1} parent=1 // pred_fallthru
      _
    // Predicated region
    $region14: #{tpu_custom_call.1} parent=1 // pred_check
      _
    $region15: #{tpu_custom_call.1} parent=1 // pred_check_branch
      %47 = sbr.rel (0) target = $region17
    $region16: #{tpu_custom_call.1} parent=1 // pred_region
      %s49 = ssub.s32 2048, 2048
      %50 = vsyncadd [#allocation9], %s49
      %s51 = sshll.u32 [#allocation8], 4
      %s52 = int_to_ptr.vmem [resolvable:$true] %s51
      %57 = dma.hbm_to_vmem [thread:$0]  %s3, 2048, %s52, [#allocation9], 64, 64, 4
    $region17: #{tpu_custom_call.1} parent=1 // pred_fallthru
      _
    // Predicated region
    $region18: #{tpu_custom_call.1} parent=1 // pred_check
      _
    $region19: #{tpu_custom_call.1} parent=1 // pred_check_branch
      %59 = sbr.rel (0) target = $region21
    $region20: #{tpu_custom_call.1} parent=1 // pred_region
      _
    $region21: #{tpu_custom_call.1} parent=1 // pred_fallthru
      _
    // Predicated region
    $region22: #{tpu_custom_call.1} parent=1 // pred_check
      _
    $region23: #{tpu_custom_call.1} parent=1 // pred_check_branch
      %61 = sbr.rel (0) target = $region25
    $region24: #{tpu_custom_call.1} parent=1 // pred_region
      %62 = dma.done [#allocation3], 128
    $region25: #{tpu_custom_call.1} parent=1 // pred_fallthru
      _
    // Predicated region
    $region26: #{tpu_custom_call.1} parent=1 // pred_check
      _
    $region27: #{tpu_custom_call.1} parent=1 // pred_check_branch
      %64 = sbr.rel (0) target = $region29
    $region28: #{tpu_custom_call.1} parent=1 // pred_region
      %65 = dma.done [#allocation6], 128
    $region29: #{tpu_custom_call.1} parent=1 // pred_fallthru
      _
    // Predicated region
    $region30: #{tpu_custom_call.1} parent=1 // pred_check
      _
    $region31: #{tpu_custom_call.1} parent=1 // pred_check_branch
      %67 = sbr.rel (0) target = $region33
    $region32: #{tpu_custom_call.1} parent=1 // pred_region
      %68 = dma.done [#allocation6], 6144
    $region33: #{tpu_custom_call.1} parent=1 // pred_fallthru
      _
    // Predicated region
    $region34: #{tpu_custom_call.1} parent=1 // pred_check
      _
    $region35: #{tpu_custom_call.1} parent=1 // pred_check_branch
      %70 = sbr.rel (0) target = $region37
    $region36: #{tpu_custom_call.1} parent=1 // pred_region
      %71 = dma.done [#allocation9], 2048
    $region37: #{tpu_custom_call.1} parent=1 // pred_fallthru
      _
    %v73 = vld [vmem:[#allocation2] sm:$0xff]
    %v74 = vld [vmem:[#allocation5] sm:$0xff]
    %v75 = vpack.c.bf16 %v73, %v73
    %v76 = vpack.c.bf16 %v74, %v74
    %v78 = vrot.slane %v76, 4
    %vm79 = vcmask 1043456
    %v82 = vsel %vm79, %v75, %v78
    %v84 = vld [vmem:[#allocation7] sm:$0xff]
    %v85 = vld [vmem:[#allocation7 + $0x18] sm:$0xff]
    %v86 = vld [vmem:[#allocation7 + $0x30] sm:$0xff]
    %v87 = vld [vmem:[#allocation7 + $0x48] sm:$0xff]
    %v88 = vld [vmem:[#allocation7 + $0x60] sm:$0xff]
    %v89 = vld [vmem:[#allocation7 + $0x78] sm:$0xff]
    %v90 = vld [vmem:[#allocation7 + $0x90] sm:$0xff]
    %v91 = vld [vmem:[#allocation7 + $0xa8] sm:$0xff]
    %v92 = vld [vmem:[#allocation7 + $0xc0] sm:$0xff]
    %v93 = vld [vmem:[#allocation7 + $0xd8] sm:$0xff]
    %v94 = vld [vmem:[#allocation7 + $0xf0] sm:$0xff]
    %v95 = vld [vmem:[#allocation7 + $0x108] sm:$0xff]
    %v96 = vld [vmem:[#allocation7 + $0x120] sm:$0xff]
    %v97 = vld [vmem:[#allocation7 + $0x138] sm:$0xff]
    %v98 = vld [vmem:[#allocation7 + $0x150] sm:$0xff]
    %v99 = vld [vmem:[#allocation7 + $0x168] sm:$0xff]
    %v116 = vunpack.c.l.b16 %v84
    %v117 = vunpack.c.h.b16 %v84
    %v118 = vunpack.c.l.b16 %v85
    %v119 = vunpack.c.h.b16 %v85
    %v120 = vunpack.c.l.b16 %v86
    %v121 = vunpack.c.h.b16 %v86
    %v122 = vunpack.c.l.b16 %v87
    %v123 = vunpack.c.h.b16 %v87
    %v124 = vunpack.c.l.b16 %v88
    %v125 = vunpack.c.h.b16 %v88
    %v126 = vunpack.c.l.b16 %v89
    %v127 = vunpack.c.h.b16 %v89
    %v128 = vunpack.c.l.b16 %v90
    %v129 = vunpack.c.h.b16 %v90
    %v130 = vunpack.c.l.b16 %v91
    %v131 = vunpack.c.h.b16 %v91
    %v132 = vunpack.c.l.b16 %v92
    %v133 = vunpack.c.h.b16 %v92
    %v134 = vunpack.c.l.b16 %v93
    %v135 = vunpack.c.h.b16 %v93
    %v136 = vunpack.c.l.b16 %v94
    %v137 = vunpack.c.h.b16 %v94
    %v138 = vunpack.c.l.b16 %v95
    %v139 = vunpack.c.h.b16 %v95
    %v140 = vunpack.c.l.b16 %v96
    %v141 = vunpack.c.h.b16 %v96
    %v142 = vunpack.c.l.b16 %v97
    %v143 = vunpack.c.h.b16 %v97
    %v144 = vunpack.c.l.b16 %v98
    %v145 = vunpack.c.h.b16 %v98
    %v146 = vunpack.c.l.b16 %v99
    %v147 = vunpack.c.h.b16 %v99
    %v148 = vpack.c.b16 %v118, %v116
    %v149 = vpack.c.b16 %v119, %v117
    %v150 = vpack.c.b16 %v122, %v120
    %v151 = vpack.c.b16 %v123, %v121
    %v152 = vpack.c.b16 %v126, %v124
    %v153 = vpack.c.b16 %v127, %v125
    %v154 = vpack.c.b16 %v130, %v128
    %v155 = vpack.c.b16 %v131, %v129
    %v156 = vpack.c.b16 %v134, %v132
    %v157 = vpack.c.b16 %v135, %v133
    %v158 = vpack.c.b16 %v138, %v136
    %v159 = vpack.c.b16 %v139, %v137
    %v160 = vpack.c.b16 %v142, %v140
    %v161 = vpack.c.b16 %v143, %v141
    %v162 = vpack.c.b16 %v146, %v144
    %v163 = vpack.c.b16 %v147, %v145
    %180 = vmatprep.subr.bf16.mxu0 %v149
    %181 = vmatpush1.bf16.msra.mxu0 %v148
    %182 = vmatprep.subr.bf16.mxu0 %v151
    %183 = vmatpush1.bf16.msra.mxu0 %v150
    %184 = vmatprep.subr.bf16.mxu0 %v153
    %185 = vmatpush1.bf16.msra.mxu0 %v152
    %186 = vmatprep.subr.bf16.mxu0 %v155
    %187 = vmatpush1.bf16.msra.mxu0 %v154
    %188 = vmatprep.subr.bf16.mxu0 %v157
    %189 = vmatpush1.bf16.msra.mxu0 %v156
    %190 = vmatprep.subr.bf16.mxu0 %v159
    %191 = vmatpush1.bf16.msra.mxu0 %v158
    %192 = vmatprep.subr.bf16.mxu0 %v161
    %193 = vmatpush1.bf16.msra.mxu0 %v160
    %194 = vmatprep.subr.bf16.mxu0 %v163
    %195 = vmatpush1.bf16.msra.mxu0 %v162
    %196 = vmatprep.subr.bf16.mxu0 0
    %197 = vmatpush1.bf16.msra.mxu0 0
    %198 = vmatprep.subr.bf16.mxu0 0
    %199 = vmatpush1.bf16.msra.mxu0 0
    %200 = vmatprep.subr.bf16.mxu0 0
    %201 = vmatpush1.bf16.msra.mxu0 0
    %202 = vmatprep.subr.bf16.mxu0 0
    %203 = vmatpush1.bf16.msra.mxu0 0
    %204 = vmatprep.subr.bf16.mxu0 0
    %205 = vmatpush1.bf16.msra.mxu0 0
    %206 = vmatprep.subr.bf16.mxu0 0
    %207 = vmatpush1.bf16.msra.mxu0 0
    %208 = vmatprep.subr.bf16.mxu0 0
    %209 = vmatpush1.bf16.msra.mxu0 0
    %210 = vmatprep.subr.bf16.mxu0 0
    %211 = vmatpush1.bf16.msra.mxu0 0
    %212 = vmatprep.mubr.bf16.mxu0 0
    %213 = vmatmul.mubr.bf16.gmra.mrb[0].mxu0 %v82
    %v214 = vpop.f32.mrb[0].mxu0
    %v215 = vpop.f32.mrb[0].mxu0
    %v216 = vadd.f32 0.0, %v215
    %v217 = vpop.f32.mrb[0].mxu0
    %v218 = vadd.f32 0.0, %v217
    %v219 = vpop.f32.mrb[0].mxu0
    %220 = vdwg.mxu0
    %v221 = vld [vmem:[%s4 + $0x1] sm:$0x1]
    %v223 = vlaneseq
    %v224 = vshrl.u32 %v223, 7
    %v225 = vsub.s32 0, %v224
    %v226 = vrot.slane %v221, %v225
    %v228 = vadd.f32 %v216, %v226
    %v229 = vmax.f32 %v228, 0.0
    %v230 = vld [vmem:[%s4] sm:$0x1]
    %v232 = vlaneseq
    %v233 = vshrl.u32 %v232, 7
    %v234 = vsub.s32 0, %v233
    %v235 = vrot.slane %v230, %v234
    %v237 = vadd.f32 %v218, %v235
    %v238 = vmax.f32 %v237, 0.0
    %v239 = vmul.f32 %v238, %v229
    %240 = vmax.xlane.f32.xlu0 %v239
    %v241 = vpop.xlane.xlu0 %240
    %v242 = vsub.f32 %v239, %v241
    %v243 = vmul.f32 %v242, 1.442695
    %v244 = vpow.pop %v243
    %245 = vadd.xlane.f32.xlu0 %v244
    %v246 = vpop.xlane.xlu0 %245
    %v247 = vrcp.pop %v246
    %v248 = vmul.f32 %v244, %v247
    %v249 = vadd.f32 %v248, 1.0
    %v250 = vmul.f32 %v73, %v249
    %v251 = vpack.c.bf16 %v250, %v250
    %v252 = vmul.f32 %v74, %v249
    %v253 = vpack.c.bf16 %v252, %v252
    %v255 = vrot.slane %v253, 4
    %v258 = vsel %vm79, %v251, %v255
    %v260 = vld [vmem:[#allocation7 + $0x8] sm:$0xff]
    %v261 = vld [vmem:[#allocation7 + $0x10] sm:$0xf]
    %v262 = vld [vmem:[#allocation7 + $0x20] sm:$0xff]
    %v263 = vld [vmem:[#allocation7 + $0x28] sm:$0xf]
    %v264 = vld [vmem:[#allocation7 + $0x38] sm:$0xff]
    %v265 = vld [vmem:[#allocation7 + $0x40] sm:$0xf]
    %v266 = vld [vmem:[#allocation7 + $0x50] sm:$0xff]
    %v267 = vld [vmem:[#allocation7 + $0x58] sm:$0xf]
    %v268 = vld [vmem:[#allocation7 + $0x68] sm:$0xff]
    %v269 = vld [vmem:[#allocation7 + $0x70] sm:$0xf]
    %v270 = vld [vmem:[#allocation7 + $0x80] sm:$0xff]
    %v271 = vld [vmem:[#allocation7 + $0x88] sm:$0xf]
    %v272 = vld [vmem:[#allocation7 + $0x98] sm:$0xff]
    %v273 = vld [vmem:[#allocation7 + $0xa0] sm:$0xf]
    %v274 = vld [vmem:[#allocation7 + $0xb0] sm:$0xff]
    %v275 = vld [vmem:[#allocation7 + $0xb8] sm:$0xf]
    %v276 = vld [vmem:[#allocation7 + $0xc8] sm:$0xff]
    %v277 = vld [vmem:[#allocation7 + $0xd0] sm:$0xf]
    %v278 = vld [vmem:[#allocation7 + $0xe0] sm:$0xff]
    %v279 = vld [vmem:[#allocation7 + $0xe8] sm:$0xf]
    %v280 = vld [vmem:[#allocation7 + $0xf8] sm:$0xff]
    %v281 = vld [vmem:[#allocation7 + $0x100] sm:$0xf]
    %v282 = vld [vmem:[#allocation7 + $0x110] sm:$0xff]
    %v283 = vld [vmem:[#allocation7 + $0x118] sm:$0xf]
    %v284 = vld [vmem:[#allocation7 + $0x128] sm:$0xff]
    %v285 = vld [vmem:[#allocation7 + $0x130] sm:$0xf]
    %v286 = vld [vmem:[#allocation7 + $0x140] sm:$0xff]
    %v287 = vld [vmem:[#allocation7 + $0x148] sm:$0xf]
    %v288 = vld [vmem:[#allocation7 + $0x158] sm:$0xff]
    %v289 = vld [vmem:[#allocation7 + $0x160] sm:$0xf]
    %v290 = vld [vmem:[#allocation7 + $0x170] sm:$0xff]
    %v291 = vld [vmem:[#allocation7 + $0x178] sm:$0xf]
    %v292 = vld [vmem:[%s4 + $0x2] sm:$0x7]
    %v294 = vlaneseq
    %v295 = vshrl.u32 %v294, 7
    %v296 = vsub.s32 0, %v295
    %v297 = vrot.slane %v292, %v296
    %v298 = vlaneseq
    %v299 = vshrl.u32 %v298, 7
    %v300 = vsub.s32 1, %v299
    %v301 = vrot.slane %v292, %v300
    %v302 = vlaneseq
    %v303 = vshrl.u32 %v302, 7
    %v304 = vsub.s32 2, %v303
    %v305 = vrot.slane %v292, %v304
    %v341 = vunpack.c.l.b16 %v260
    %v342 = vunpack.c.h.b16 %v260
    %v343 = vunpack.c.l.b16 %v261
    %v344 = vunpack.c.l.b16 %v262
    %v345 = vunpack.c.h.b16 %v262
    %v346 = vunpack.c.l.b16 %v263
    %v347 = vunpack.c.l.b16 %v264
    %v348 = vunpack.c.h.b16 %v264
    %v349 = vunpack.c.l.b16 %v265
    %v350 = vunpack.c.l.b16 %v266
    %v351 = vunpack.c.h.b16 %v266
    %v352 = vunpack.c.l.b16 %v267
    %v353 = vunpack.c.l.b16 %v268
    %v354 = vunpack.c.h.b16 %v268
    %v355 = vunpack.c.l.b16 %v269
    %v356 = vunpack.c.l.b16 %v270
    %v357 = vunpack.c.h.b16 %v270
    %v358 = vunpack.c.l.b16 %v271
    %v359 = vunpack.c.l.b16 %v272
    %v360 = vunpack.c.h.b16 %v272
    %v361 = vunpack.c.l.b16 %v273
    %v362 = vunpack.c.l.b16 %v274
    %v363 = vunpack.c.h.b16 %v274
    %v364 = vunpack.c.l.b16 %v275
    %v365 = vunpack.c.l.b16 %v276
    %v366 = vunpack.c.h.b16 %v276
    %v367 = vunpack.c.l.b16 %v277
    %v368 = vunpack.c.l.b16 %v278
    %v369 = vunpack.c.h.b16 %v278
    %v370 = vunpack.c.l.b16 %v279
    %v371 = vunpack.c.l.b16 %v280
    %v372 = vunpack.c.h.b16 %v280
    %v373 = vunpack.c.l.b16 %v281
    %v374 = vunpack.c.l.b16 %v282
    %v375 = vunpack.c.h.b16 %v282
    %v376 = vunpack.c.l.b16 %v283
    %v377 = vunpack.c.l.b16 %v284
    %v378 = vunpack.c.h.b16 %v284
    %v379 = vunpack.c.l.b16 %v285
    %v380 = vunpack.c.l.b16 %v286
    %v381 = vunpack.c.h.b16 %v286
    %v382 = vunpack.c.l.b16 %v287
    %v383 = vunpack.c.l.b16 %v288
    %v384 = vunpack.c.h.b16 %v288
    %v385 = vunpack.c.l.b16 %v289
    %v386 = vunpack.c.l.b16 %v290
    %v387 = vunpack.c.h.b16 %v290
    %v388 = vunpack.c.l.b16 %v291
    %v389 = vpack.c.b16 %v344, %v341
    %v390 = vpack.c.b16 %v345, %v342
    %v391 = vpack.c.b16 %v346, %v343
    %v392 = vpack.c.b16 %v350, %v347
    %v393 = vpack.c.b16 %v351, %v348
    %v394 = vpack.c.b16 %v352, %v349
    %v395 = vpack.c.b16 %v356, %v353
    %v396 = vpack.c.b16 %v357, %v354
    %v397 = vpack.c.b16 %v358, %v355
    %v398 = vpack.c.b16 %v362, %v359
    %v399 = vpack.c.b16 %v363, %v360
    %v400 = vpack.c.b16 %v364, %v361
    %v401 = vpack.c.b16 %v368, %v365
    %v402 = vpack.c.b16 %v369, %v366
    %v403 = vpack.c.b16 %v370, %v367
    %v404 = vpack.c.b16 %v374, %v371
    %v405 = vpack.c.b16 %v375, %v372
    %v406 = vpack.c.b16 %v376, %v373
    %v407 = vpack.c.b16 %v380, %v377
    %v408 = vpack.c.b16 %v381, %v378
    %v409 = vpack.c.b16 %v382, %v379
    %v410 = vpack.c.b16 %v386, %v383
    %v411 = vpack.c.b16 %v387, %v384
    %v412 = vpack.c.b16 %v388, %v385
    %437 = vmatprep.subr.bf16.mxu0 %v390
    %438 = vmatpush1.bf16.msra.mxu0 %v389
    %439 = vmatprep.subr.bf16.mxu0 %v393
    %440 = vmatpush1.bf16.msra.mxu0 %v392
    %441 = vmatprep.subr.bf16.mxu0 %v396
    %442 = vmatpush1.bf16.msra.mxu0 %v395
    %443 = vmatprep.subr.bf16.mxu0 %v399
    %444 = vmatpush1.bf16.msra.mxu0 %v398
    %445 = vmatprep.subr.bf16.mxu0 %v402
    %446 = vmatpush1.bf16.msra.mxu0 %v401
    %447 = vmatprep.subr.bf16.mxu0 %v405
    %448 = vmatpush1.bf16.msra.mxu0 %v404
    %449 = vmatprep.subr.bf16.mxu0 %v408
    %450 = vmatpush1.bf16.msra.mxu0 %v407
    %451 = vmatprep.subr.bf16.mxu0 %v411
    %452 = vmatpush1.bf16.msra.mxu0 %v410
    %453 = vmatprep.subr.bf16.mxu0 0
    %454 = vmatpush1.bf16.msra.mxu0 0
    %455 = vmatprep.subr.bf16.mxu0 0
    %456 = vmatpush1.bf16.msra.mxu0 0
    %457 = vmatprep.subr.bf16.mxu0 0
    %458 = vmatpush1.bf16.msra.mxu0 0
    %459 = vmatprep.subr.bf16.mxu0 0
    %460 = vmatpush1.bf16.msra.mxu0 0
    %461 = vmatprep.subr.bf16.mxu0 0
    %462 = vmatpush1.bf16.msra.mxu0 0
    %463 = vmatprep.subr.bf16.mxu0 0
    %464 = vmatpush1.bf16.msra.mxu0 0
    %465 = vmatprep.subr.bf16.mxu0 0
    %466 = vmatpush1.bf16.msra.mxu0 0
    %467 = vmatprep.subr.bf16.mxu0 0
    %468 = vmatpush1.bf16.msra.mxu0 0
    %469 = vmatprep.mubr.bf16.mxu0 0
    %470 = vmatmul.mubr.bf16.gmra.mrb[0].mxu0 %v258
    %v471 = vpop.f32.mrb[0].mxu0
    %v472 = vadd.f32 %v297, %v471
    %v473 = vpop.f32.mrb[0].mxu0
    %v474 = vadd.f32 %v301, %v473
    %v475 = vpop.f32.mrb[0].mxu0
    %v476 = vadd.f32 %v297, %v475
    %v477 = vpop.f32.mrb[0].mxu0
    %v478 = vadd.f32 %v301, %v477
    %479 = vdwg.mxu0
    %480 = vmatprep.subr.bf16.mxu0 0
    %481 = vmatpush1.bf16.msra.mxu0 %v391
    %482 = vmatprep.subr.bf16.mxu0 0
    %483 = vmatpush1.bf16.msra.mxu0 %v394
    %484 = vmatprep.subr.bf16.mxu0 0
    %485 = vmatpush1.bf16.msra.mxu0 %v397
    %486 = vmatprep.subr.bf16.mxu0 0
    %487 = vmatpush1.bf16.msra.mxu0 %v400
    %488 = vmatprep.subr.bf16.mxu0 0
    %489 = vmatpush1.bf16.msra.mxu0 %v403
    %490 = vmatprep.subr.bf16.mxu0 0
    %491 = vmatpush1.bf16.msra.mxu0 %v406
    %492 = vmatprep.subr.bf16.mxu0 0
    %493 = vmatpush1.bf16.msra.mxu0 %v409
    %494 = vmatprep.subr.bf16.mxu0 0
    %495 = vmatpush1.bf16.msra.mxu0 %v412
    %496 = vmatprep.subr.bf16.mxu0 0
    %497 = vmatpush1.bf16.msra.mxu0 0
    %498 = vmatprep.subr.bf16.mxu0 0
    %499 = vmatpush1.bf16.msra.mxu0 0
    %500 = vmatprep.subr.bf16.mxu0 0
    %501 = vmatpush1.bf16.msra.mxu0 0
    %502 = vmatprep.subr.bf16.mxu0 0
    %503 = vmatpush1.bf16.msra.mxu0 0
    %504 = vmatprep.subr.bf16.mxu0 0
    %505 = vmatpush1.bf16.msra.mxu0 0
    %506 = vmatprep.subr.bf16.mxu0 0
    %507 = vmatpush1.bf16.msra.mxu0 0
    %508 = vmatprep.subr.bf16.mxu0 0
    %509 = vmatpush1.bf16.msra.mxu0 0
    %510 = vmatprep.subr.bf16.mxu0 0
    %511 = vmatpush1.bf16.msra.mxu0 0
    %512 = vmatprep.mubr.bf16.mxu0 0
    %513 = vmatmul.mubr.bf16.gmra.mrb[0].mxu0 %v258
    %v514 = vpop.f32.mrb[0].mxu0
    %v515 = vadd.f32 %v305, %v514
    %v516 = vpop.f32.mrb[0].mxu0
    %v517 = vpop.f32.mrb[0].mxu0
    %v518 = vadd.f32 %v305, %v517
    %v519 = vpop.f32.mrb[0].mxu0
    %520 = vdwg.mxu0
    %v521 = vmul.f32 %v472, %v474
    %v522 = vmul.f32 %v476, %v478
    %523 = vadd.xlane.f32.xlu0 %v521
    %v524 = vpop.xlane.xlu0 %523
    %525 = vadd.xlane.f32.xlu0 %v522
    %v526 = vpop.xlane.xlu0 %525
    %v527 = vmul.f32 %v472, %v478
    %v528 = vmul.f32 %v476, %v474
    %529 = vadd.xlane.f32.xlu0 %v527
    %v530 = vpop.xlane.xlu0 %529
    %531 = vadd.xlane.f32.xlu0 %v528
    %v532 = vpop.xlane.xlu0 %531
    %vm533 = vcmask 7168
    %v534 = vsel %vm533, %v524, %v530
    %v535 = vsel %vm533, %v526, %v532
    %vm536 = vcmask 15360
    %v537 = vsel %vm536, %v534, -inf
    %538 = vmax.xlane.f32.xlu0 %v537
    %v539 = vpop.xlane.xlu0 %538
    %v540 = vsel %vm536, %v535, -inf
    %541 = vmax.xlane.f32.xlu0 %v540
    %v542 = vpop.xlane.xlu0 %541
    %v543 = vsub.f32 %v534, %v539
    %v544 = vsub.f32 %v535, %v542
    %v545 = vmul.f32 %v543, 1.442695
    %v546 = vpow.pop %v545
    %v547 = vmul.f32 %v544, 1.442695
    %v548 = vpow.pop %v547
    %v549 = vsel %vm536, %v546, 0.0
    %550 = vadd.xlane.f32.xlu0 %v549
    %v551 = vpop.xlane.xlu0 %550
    %v552 = vsel %vm536, %v548, 0.0
    %553 = vadd.xlane.f32.xlu0 %v552
    %v554 = vpop.xlane.xlu0 %553
    %v555 = vrcp.pop %v551
    %v556 = vrcp.pop %v554
    %v557 = vmul.f32 %v546, %v555
    %v558 = vmul.f32 %v548, %v556
    %560 = vset.pattern.permute.xlu0 0
    %561 = vperm.xlu0 %560, %v557
    %v562 = vpop.permute.xlu0 %561
    %565 = vset.pattern.permute.xlu0 0
    %566 = vperm.xlu0 %565, %v558
    %v567 = vpop.permute.xlu0 %566
    %v569 = vmul.f32 %v562, %v515
    %v570 = vmul.f32 %v567, %v518
    %571 = vset.pattern.permute.xlu0 1
    %572 = vperm.xlu0 %571, %v557
    %v573 = vpop.permute.xlu0 %572
    %575 = vset.pattern.permute.xlu0 1
    %576 = vperm.xlu0 %575, %v558
    %v577 = vpop.permute.xlu0 %576
    %v579 = vmul.f32 %v573, %v518
    %v580 = vmul.f32 %v577, %v515
    %v581 = vadd.f32 %v569, %v579
    %v582 = vadd.f32 %v570, %v580
    %v583 = vpack.c.bf16 %v582, %v581
    %v584 = vld [vmem:[#allocation7 + $0x14] sm:$0xf]
    %v585 = vld [vmem:[#allocation7 + $0x2c] sm:$0xf]
    %v586 = vld [vmem:[#allocation7 + $0x44] sm:$0xf]
    %v587 = vld [vmem:[#allocation7 + $0x5c] sm:$0xf]
    %v588 = vld [vmem:[#allocation7 + $0x74] sm:$0xf]
    %v589 = vld [vmem:[#allocation7 + $0x8c] sm:$0xf]
    %v590 = vld [vmem:[#allocation7 + $0xa4] sm:$0xf]
    %v591 = vld [vmem:[#allocation7 + $0xbc] sm:$0xf]
    %v592 = vld [vmem:[#allocation7 + $0xd4] sm:$0xf]
    %v593 = vld [vmem:[#allocation7 + $0xec] sm:$0xf]
    %v594 = vld [vmem:[#allocation7 + $0x104] sm:$0xf]
    %v595 = vld [vmem:[#allocation7 + $0x11c] sm:$0xf]
    %v596 = vld [vmem:[#allocation7 + $0x134] sm:$0xf]
    %v597 = vld [vmem:[#allocation7 + $0x14c] sm:$0xf]
    %v598 = vld [vmem:[#allocation7 + $0x164] sm:$0xf]
    %v599 = vld [vmem:[#allocation7 + $0x17c] sm:$0xf]
    %v600 = vld [vmem:[%s4 + $0x5] sm:$0x1]
    %v602 = vlaneseq
    %v603 = vshrl.u32 %v602, 7
    %v604 = vsub.s32 0, %v603
    %v605 = vrot.slane %v600, %v604
    %v623 = vunpack.c.l.b16 %v584
    %v624 = vunpack.c.l.b16 %v585
    %v625 = vunpack.c.l.b16 %v586
    %v626 = vunpack.c.l.b16 %v587
    %v627 = vunpack.c.l.b16 %v588
    %v628 = vunpack.c.l.b16 %v589
    %v629 = vunpack.c.l.b16 %v590
    %v630 = vunpack.c.l.b16 %v591
    %v631 = vunpack.c.l.b16 %v592
    %v632 = vunpack.c.l.b16 %v593
    %v633 = vunpack.c.l.b16 %v594
    %v634 = vunpack.c.l.b16 %v595
    %v635 = vunpack.c.l.b16 %v596
    %v636 = vunpack.c.l.b16 %v597
    %v637 = vunpack.c.l.b16 %v598
    %v638 = vunpack.c.l.b16 %v599
    %v639 = vpack.c.b16 %v624, %v623
    %v640 = vpack.c.b16 %v626, %v625
    %v641 = vpack.c.b16 %v628, %v627
    %v642 = vpack.c.b16 %v630, %v629
    %v643 = vpack.c.b16 %v632, %v631
    %v644 = vpack.c.b16 %v634, %v633
    %v645 = vpack.c.b16 %v636, %v635
    %v646 = vpack.c.b16 %v638, %v637
    %655 = vmatprep.subr.bf16.mxu0 0
    %656 = vmatpush1.bf16.msra.mxu0 %v639
    %657 = vmatprep.subr.bf16.mxu0 0
    %658 = vmatpush1.bf16.msra.mxu0 %v640
    %659 = vmatprep.subr.bf16.mxu0 0
    %660 = vmatpush1.bf16.msra.mxu0 %v641
    %661 = vmatprep.subr.bf16.mxu0 0
    %662 = vmatpush1.bf16.msra.mxu0 %v642
    %663 = vmatprep.subr.bf16.mxu0 0
    %664 = vmatpush1.bf16.msra.mxu0 %v643
    %665 = vmatprep.subr.bf16.mxu0 0
    %666 = vmatpush1.bf16.msra.mxu0 %v644
    %667 = vmatprep.subr.bf16.mxu0 0
    %668 = vmatpush1.bf16.msra.mxu0 %v645
    %669 = vmatprep.subr.bf16.mxu0 0
    %670 = vmatpush1.bf16.msra.mxu0 %v646
    %671 = vmatprep.subr.bf16.mxu0 0
    %672 = vmatpush1.bf16.msra.mxu0 0
    %673 = vmatprep.subr.bf16.mxu0 0
    %674 = vmatpush1.bf16.msra.mxu0 0
    %675 = vmatprep.subr.bf16.mxu0 0
    %676 = vmatpush1.bf16.msra.mxu0 0
    %677 = vmatprep.subr.bf16.mxu0 0
    %678 = vmatpush1.bf16.msra.mxu0 0
    %679 = vmatprep.subr.bf16.mxu0 0
    %680 = vmatpush1.bf16.msra.mxu0 0
    %681 = vmatprep.subr.bf16.mxu0 0
    %682 = vmatpush1.bf16.msra.mxu0 0
    %683 = vmatprep.subr.bf16.mxu0 0
    %684 = vmatpush1.bf16.msra.mxu0 0
    %685 = vmatprep.subr.bf16.mxu0 0
    %686 = vmatpush1.bf16.msra.mxu0 0
    %687 = vmatprep.mubr.bf16.mxu0 0
    %688 = vmatmul.mubr.bf16.gmra.mrb[0].mxu0 %v583
    %v689 = vpop.f32.mrb[0].mxu0
    %v690 = vadd.f32 %v605, %v689
    %v691 = vpop.f32.mrb[0].mxu0
    %v692 = vpop.f32.mrb[0].mxu0
    %v693 = vadd.f32 %v605, %v692
    %v694 = vpop.f32.mrb[0].mxu0
    %695 = vdwg.mxu0
    %v696 = vpack.c.bf16 %v693, %v690
    %v698 = vrot.slane %v696, 4
    %v700 = vld [vmem:[#allocation8] sm:$0xf]
    %v701 = vld [vmem:[#allocation8 + $0x4] sm:$0xf]
    %v702 = vld [vmem:[#allocation8 + $0x8] sm:$0xf]
    %v703 = vld [vmem:[#allocation8 + $0xc] sm:$0xf]
    %v704 = vld [vmem:[#allocation8 + $0x10] sm:$0xf]
    %v705 = vld [vmem:[#allocation8 + $0x14] sm:$0xf]
    %v706 = vld [vmem:[#allocation8 + $0x18] sm:$0xf]
    %v707 = vld [vmem:[#allocation8 + $0x1c] sm:$0xf]
    %v708 = vld [vmem:[#allocation8 + $0x20] sm:$0xf]
    %v709 = vld [vmem:[#allocation8 + $0x24] sm:$0xf]
    %v710 = vld [vmem:[#allocation8 + $0x28] sm:$0xf]
    %v711 = vld [vmem:[#allocation8 + $0x2c] sm:$0xf]
    %v712 = vld [vmem:[#allocation8 + $0x30] sm:$0xf]
    %v713 = vld [vmem:[#allocation8 + $0x34] sm:$0xf]
    %v714 = vld [vmem:[#allocation8 + $0x38] sm:$0xf]
    %v715 = vld [vmem:[#allocation8 + $0x3c] sm:$0xf]
    %v716 = vld [vmem:[#allocation8 + $0x40] sm:$0xf]
    %v717 = vld [vmem:[#allocation8 + $0x44] sm:$0xf]
    %v718 = vld [vmem:[#allocation8 + $0x48] sm:$0xf]
    %v719 = vld [vmem:[#allocation8 + $0x4c] sm:$0xf]
    %v720 = vld [vmem:[#allocation8 + $0x50] sm:$0xf]
    %v721 = vld [vmem:[#allocation8 + $0x54] sm:$0xf]
    %v722 = vld [vmem:[#allocation8 + $0x58] sm:$0xf]
    %v723 = vld [vmem:[#allocation8 + $0x5c] sm:$0xf]
    %v724 = vld [vmem:[#allocation8 + $0x60] sm:$0xf]
    %v725 = vld [vmem:[#allocation8 + $0x64] sm:$0xf]
    %v726 = vld [vmem:[#allocation8 + $0x68] sm:$0xf]
    %v727 = vld [vmem:[#allocation8 + $0x6c] sm:$0xf]
    %v728 = vld [vmem:[#allocation8 + $0x70] sm:$0xf]
    %v729 = vld [vmem:[#allocation8 + $0x74] sm:$0xf]
    %v730 = vld [vmem:[#allocation8 + $0x78] sm:$0xf]
    %v731 = vld [vmem:[#allocation8 + $0x7c] sm:$0xf]
    %v732 = vld [vmem:[%s4 + $0x6] sm:$0x1]
    %v734 = vlaneseq
    %v735 = vshrl.u32 %v734, 7
    %v736 = vsub.s32 0, %v735
    %v737 = vrot.slane %v732, %v736
    %v771 = vunpack.c.l.b16 %v700
    %v772 = vunpack.c.l.b16 %v701
    %v773 = vunpack.c.l.b16 %v702
    %v774 = vunpack.c.l.b16 %v703
    %v775 = vunpack.c.l.b16 %v704
    %v776 = vunpack.c.l.b16 %v705
    %v777 = vunpack.c.l.b16 %v706
    %v778 = vunpack.c.l.b16 %v707
    %v779 = vunpack.c.l.b16 %v708
    %v780 = vunpack.c.l.b16 %v709
    %v781 = vunpack.c.l.b16 %v710
    %v782 = vunpack.c.l.b16 %v711
    %v783 = vunpack.c.l.b16 %v712
    %v784 = vunpack.c.l.b16 %v713
    %v785 = vunpack.c.l.b16 %v714
    %v786 = vunpack.c.l.b16 %v715
    %v787 = vunpack.c.l.b16 %v716
    %v788 = vunpack.c.l.b16 %v717
    %v789 = vunpack.c.l.b16 %v718
    %v790 = vunpack.c.l.b16 %v719
    %v791 = vunpack.c.l.b16 %v720
    %v792 = vunpack.c.l.b16 %v721
    %v793 = vunpack.c.l.b16 %v722
    %v794 = vunpack.c.l.b16 %v723
    %v795 = vunpack.c.l.b16 %v724
    %v796 = vunpack.c.l.b16 %v725
    %v797 = vunpack.c.l.b16 %v726
    %v798 = vunpack.c.l.b16 %v727
    %v799 = vunpack.c.l.b16 %v728
    %v800 = vunpack.c.l.b16 %v729
    %v801 = vunpack.c.l.b16 %v730
    %v802 = vunpack.c.l.b16 %v731
    %v803 = vpack.c.b16 %v772, %v771
    %v804 = vpack.c.b16 %v774, %v773
    %v805 = vpack.c.b16 %v776, %v775
    %v806 = vpack.c.b16 %v778, %v777
    %v807 = vpack.c.b16 %v780, %v779
    %v808 = vpack.c.b16 %v782, %v781
    %v809 = vpack.c.b16 %v784, %v783
    %v810 = vpack.c.b16 %v786, %v785
    %v811 = vpack.c.b16 %v788, %v787
    %v812 = vpack.c.b16 %v790, %v789
    %v813 = vpack.c.b16 %v792, %v791
    %v814 = vpack.c.b16 %v794, %v793
    %v815 = vpack.c.b16 %v796, %v795
    %v816 = vpack.c.b16 %v798, %v797
    %v817 = vpack.c.b16 %v800, %v799
    %v818 = vpack.c.b16 %v802, %v801
    %835 = vmatprep.subr.bf16.mxu0 0
    %836 = vmatpush1.bf16.msra.mxu0 %v803
    %837 = vmatprep.subr.bf16.mxu0 0
    %838 = vmatpush1.bf16.msra.mxu0 %v804
    %839 = vmatprep.subr.bf16.mxu0 0
    %840 = vmatpush1.bf16.msra.mxu0 %v805
    %841 = vmatprep.subr.bf16.mxu0 0
    %842 = vmatpush1.bf16.msra.mxu0 %v806
    %843 = vmatprep.subr.bf16.mxu0 0
    %844 = vmatpush1.bf16.msra.mxu0 %v807
    %845 = vmatprep.subr.bf16.mxu0 0
    %846 = vmatpush1.bf16.msra.mxu0 %v808
    %847 = vmatprep.subr.bf16.mxu0 0
    %848 = vmatpush1.bf16.msra.mxu0 %v809
    %849 = vmatprep.subr.bf16.mxu0 0
    %850 = vmatpush1.bf16.msra.mxu0 %v810
    %851 = vmatprep.subr.bf16.mxu0 0
    %852 = vmatpush1.bf16.msra.mxu0 %v811
    %853 = vmatprep.subr.bf16.mxu0 0
    %854 = vmatpush1.bf16.msra.mxu0 %v812
    %855 = vmatprep.subr.bf16.mxu0 0
    %856 = vmatpush1.bf16.msra.mxu0 %v813
    %857 = vmatprep.subr.bf16.mxu0 0
    %858 = vmatpush1.bf16.msra.mxu0 %v814
    %859 = vmatprep.subr.bf16.mxu0 0
    %860 = vmatpush1.bf16.msra.mxu0 %v815
    %861 = vmatprep.subr.bf16.mxu0 0
    %862 = vmatpush1.bf16.msra.mxu0 %v816
    %863 = vmatprep.subr.bf16.mxu0 0
    %864 = vmatpush1.bf16.msra.mxu0 %v817
    %865 = vmatprep.subr.bf16.mxu0 0
    %866 = vmatpush1.bf16.msra.mxu0 %v818
    %867 = vmatprep.mubr.bf16.mxu0 %v698
    %868 = vmatmul.mubr.bf16.gmra.mrb[0].mxu0 %v696
    %v869 = vpop.f32.mrb[0].mxu0
    %v870 = vadd.f32 %v737, %v869
    %v871 = vpop.f32.mrb[0].mxu0
    %v872 = vpop.f32.mrb[0].mxu0
    %v873 = vpop.f32.mrb[0].mxu0
    %874 = vdwg.mxu0
    %v875 = vrot.slane %v870, 4
    %v876 = vadd.f32 %v870, %v875
    %v877 = vrot.slane %v876, 2
    %v878 = vadd.f32 %v876, %v877
    %v879 = vrot.slane %v878, 1
    %v880 = vadd.f32 %v878, %v879
    %v881 = vrcp.pop 8.0
    %v882 = vmul.f32 %v880, %v881
    %v883 = vsub.f32 %v870, %v882
    %v884 = vmul.f32 %v883, %v883
    %v885 = vrot.slane %v884, 4
    %v886 = vadd.f32 %v884, %v885
    %v887 = vrot.slane %v886, 2
    %v888 = vadd.f32 %v886, %v887
    %v889 = vrot.slane %v888, 1
    %v890 = vadd.f32 %v888, %v889
    %v891 = vmul.f32 %v890, %v881
    %v892 = vadd.f32 %v891, 1e-05
    %v893 = vrsqrt.pop %v892
    %v894 = vmul.f32 %v883, %v893
    %v895 = vld [vmem:[%s4 + $0x7] sm:$0x1]
    %v897 = vlaneseq
    %v898 = vshrl.u32 %v897, 7
    %v899 = vsub.s32 0, %v898
    %v900 = vrot.slane %v895, %v899
    %v902 = vmul.f32 %v894, %v900
    %v903 = vld [vmem:[%s4 + $0x8] sm:$0x1]
    %v905 = vlaneseq
    %v906 = vshrl.u32 %v905, 7
    %v907 = vsub.s32 0, %v906
    %v908 = vrot.slane %v903, %v907
    %v910 = vadd.f32 %v902, %v908
    %v911 = vmul.f32 %v910, %v910
    %912 = vadd.xlane.f32.xlu0 %v911
    %v913 = vpop.xlane.xlu0 %912
    %v914 = vmax.f32 %v913, 1e-24
    %v915 = vrsqrt.pop %v914
    %v916 = vmul.f32 %v910, %v915
    %917 = vst [vmem:[#allocation10] sm:$0xff] %v916
    // Predicated region
    $region38: #{tpu_custom_call.1} parent=1 // pred_check
      _
    $region39: #{tpu_custom_call.1} parent=1 // pred_check_branch
      %919 = sbr.rel (0) target = $region41
    $region40: #{tpu_custom_call.1} parent=1 // pred_region
      %s921 = ssub.s32 128, 128
      %922 = vsyncadd [#allocation4], %s921
      %s924 = sshll.u32 [#allocation10], 4
      %s925 = int_to_ptr.vmem [resolvable:$true] %s924
      %927 = dma.vmem_to_hbm [thread:$0]  %s925, 128, %s5, [#allocation4]
    $region41: #{tpu_custom_call.1} parent=1 // pred_fallthru
      _
    // Predicated region
    $region42: #{tpu_custom_call.1} parent=1 // pred_check
      _
    $region43: #{tpu_custom_call.1} parent=1 // pred_check_branch
      %929 = sbr.rel (0) target = $region45
    $region44: #{tpu_custom_call.1} parent=1 // pred_region
      %930 = dma.done [#allocation4], 128
    $region45: #{tpu_custom_call.1} parent=1 // pred_fallthru
      _
    %931 = vsyncpa [#allocation3], 1
    %932 = vsyncpa [#allocation6], 1
    %933 = vsyncpa [#allocation9], 1
    %934 = vsyncpa [#allocation4], 1

</llo_original>
